<compile_context>
chip_gen: v5e
topology: v5e:2x2
jax: 0.10.0
libtpu: 0.0.40
codegen_flags: <defaults>
</compile_context>

<pallas_src>
import functools

import jax
import jax.numpy as jnp
from jax.experimental import pallas as pl
from jax.experimental.pallas import tpu as pltpu


_MAX_TILE_LANES = 128 * 1024  # review guidance: ~32K-128K lanes per tile


def _round_up(v, m):
    return (v + m - 1) // m * m


def _vmem_capacity_bytes():
    """Per-generation VMEM capacity; conservative (v7x) fallback."""
    try:
        info = pltpu.get_tpu_info()
        cap = getattr(info, "vmem_capacity_bytes", None)
        if cap:
            return int(cap)
    except Exception:
        pass
    return 64 * 1024 * 1024


def _alpha_array(alpha, c):
    if alpha is None:
        return jnp.ones((c,), jnp.float32)
    if isinstance(alpha, (float, int)):
        alpha = [float(alpha), 1.0 - float(alpha)]  # binary case, like PyTorch
    a = jnp.asarray(alpha, jnp.float32).reshape(-1)
    assert a.shape[0] == c, "alpha length must match number of classes"
    return a


def _pow_gamma(base, gamma):
    """(1-pt)**gamma: small integer gamma -> VPU multiply chain (no EUP)."""
    if gamma == 0:
        return jnp.ones_like(base)
    g = float(gamma)
    if g.is_integer() and 0 < g <= 16:
        out = base
        for _ in range(int(g) - 1):
            out = out * base
        return out
    return base ** gamma


# ---------------------------------------------------------------------------
# Kernel for (N, C, P) segmentation-style inputs (pixels on lanes).
# ---------------------------------------------------------------------------
def _focal_kernel(x_ref, t_ref, a_ref, o_ref, acc_ref, *,
                  gamma, valid_p, tile_p, n_inner, num_pt):
    """One (batch, outer-chunk, pixel-tile) grid step.

    x_ref   : (1, C, tp) logits (input dtype; cast to f32 for math)
    t_ref   : (1, 1, tp) int8/int32 target class per pixel
    a_ref   : (1, C, 1)  f32 per-class alpha weights (ones if alpha is None)
    o_ref   : (1, 1, 1)  f32 per-(batch, chunk) loss sum (written in epilogue)
    acc_ref : (1, 1, tp) f32 lane-shaped running partial sums (VMEM scratch)
    """
    k = pl.program_id(2)

    @pl.when(k == 0)
    def _():
        acc_ref[...] = jnp.zeros_like(acc_ref)

    x = x_ref[...].astype(jnp.float32)                        # (1, C, tp)
    t = t_ref[...].astype(jnp.int32)                          # (1, 1, tp)

    # Numerically stable softmax pieces along the class (sublane) axis.
    m = jnp.max(x, axis=1, keepdims=True)                     # (1, 1, tp)
    z = x - m
    ez = jnp.exp(z)                                           # (1, C, tp)
    sumexp = jnp.sum(ez, axis=1, keepdims=True)               # (1, 1, tp)
    logp = z - jnp.log(sumexp)                                # (1, C, tp)

    # gather(1, target) via one-hot mask (no dynamic vector gather on TPU).
    # TODO(synk): targets outside [0, C) silently contribute 0 loss (PyTorch
    # gather would raise); no ignore_index semantics are implemented.
    cls = jax.lax.broadcasted_iota(jnp.int32, x.shape, 1)
    onehot = (cls == t).astype(jnp.float32)                   # (1, C, tp)

    # alpha fused into the one-hot gather: sum(logp*onehot*alpha) == at*logpt.
    logpt_w = jnp.sum(logp * (onehot * a_ref[...]), axis=1, keepdims=True)

    # pt from the already-computed exp(z): removes one EUP exp per pixel.
    # (approx=True reciprocal is an option on compute-bound v7x; kept exact
    #  here to stay bit-tight with the reference.)
    exp_zt = jnp.sum(ez * onehot, axis=1, keepdims=True)      # (1, 1, tp)
    pt = exp_zt * pl.reciprocal(sumexp, approx=False)

    loss = -1.0 * _pow_gamma(1.0 - pt, gamma) * logpt_w       # (1, 1, tp)

    if valid_p % tile_p != 0:
        # Only the last *global* pixel tile is partial: gate the iota/compare/
        # select behind pl.when so full tiles pay a plain VPU add only.
        tidx = pl.program_id(1) * n_inner + k

        @pl.when(tidx == num_pt - 1)
        def _():
            lane = jax.lax.broadcasted_iota(jnp.int32, loss.shape, 2)
            mask = (tidx * tile_p + lane) < valid_p
            acc_ref[...] += jnp.where(mask, loss, 0.0)

        @pl.when(tidx != num_pt - 1)
        def _():
            acc_ref[...] += loss
    else:
        acc_ref[...] += loss

    @pl.when(k == pl.num_programs(2) - 1)
    def _():
        # Single cross-lane reduction per (batch, chunk) in the epilogue.
        o_ref[...] = jnp.sum(acc_ref[...], axis=2, keepdims=True)


def _focal_loss_nchw(x, target, gamma, alpha, size_average, tile_p,
                     work_budget, vmem_limit):
    n, c = x.shape[0], x.shape[1]
    x3 = x.reshape(n, c, -1)                     # (N, C, P): free view
    p = x3.shape[2]

    # Small-int targets: 1 B/px of HBM read traffic instead of 4.
    # TODO(synk): callers that can produce int8 targets upstream avoid this
    # one extra cast pass entirely.
    if c <= 127:
        if target.dtype != jnp.int8:
            target = target.astype(jnp.int8)
    else:
        target = target.astype(jnp.int32)
    t3 = target.reshape(n, 1, p)

    a = _alpha_array(alpha, c).reshape(1, c, 1)

    # ---- padding-aware VMEM accounting (bytes per pixel/lane of the tile) --
    x_item = x3.dtype.itemsize
    sub_mult = 8 * max(1, 4 // x_item)                # f32 -> 8, bf16 -> 16
    x_bytes = _round_up(c, sub_mult) * x_item         # padded logits block
    t_bytes = 32                                      # (1,1,tp) int8/int32 pad
    acc_bytes = 32                                    # (1,1,tp) f32 scratch
    per_px = 2 * (x_bytes + t_bytes) + acc_bytes      # x, t double-buffered
    budget_px = max(128, work_budget // per_px)

    tp = min(budget_px, _MAX_TILE_LANES)
    if tile_p is not None:
        tp = min(tp, tile_p)
    tp = max(128, (tp // 128) * 128)
    if p <= tp:
        tp = p                                        # full-extent lane block
    num_pt = pl.cdiv(p, tp)

    # v7x megacore: split pixel tiles across a second "parallel" grid axis so
    # both TensorCores stay busy for N=1 / odd N.  Harmless on 1-TC chips.
    n_outer = 2 if (num_pt >= 2 and num_pt % 2 == 0) else 1
    n_inner = num_pt // n_outer

    kernel = functools.partial(_focal_kernel, gamma=gamma, valid_p=p,
                               tile_p=tp, n_inner=n_inner, num_pt=num_pt)
    partial_sums = pl.pallas_call(
        kernel,
        out_shape=jax.ShapeDtypeStruct((n * n_outer, 1, 1), jnp.float32),
        grid_spec=pltpu.PrefetchScalarGridSpec(
            num_scalar_prefetch=0,
            grid=(n, n_outer, n_inner),
            in_specs=[
                pl.BlockSpec((1, c, tp),
                             lambda i, j, k: (i, 0, j * n_inner + k)),
                pl.BlockSpec((1, 1, tp),
                             lambda i, j, k: (i, 0, j * n_inner + k)),
                pl.BlockSpec((1, c, 1), lambda i, j, k: (0, 0, 0)),
            ],
            out_specs=pl.BlockSpec((1, 1, 1),
                                   lambda i, j, k: (i * n_outer + j, 0, 0)),
            scratch_shapes=[pltpu.VMEM((1, 1, tp), jnp.float32)],
        ),
        compiler_params=pltpu.CompilerParams(
            dimension_semantics=("parallel", "parallel", "arbitrary"),
            vmem_limit_bytes=vmem_limit),
    )(x3, t3, a)

    loss_sum = jnp.sum(partial_sums)
    rows = n * p
    return loss_sum / rows if size_average else loss_sum


# ---------------------------------------------------------------------------
# Kernel for 2-D (rows, C) classification inputs: native layout, no transpose.
# ---------------------------------------------------------------------------
def _focal_kernel_2d(x_ref, t_ref, a_ref, o_ref, *, gamma, valid_r, tile_r):
    """x_ref: (tr, C); t_ref: (tr, 1) int32; a_ref: (1, C); o_ref: (1, 1, 1)."""
    i = pl.program_id(0)

    x = x_ref[...].astype(jnp.float32)                        # (tr, C)
    t = t_ref[...].astype(jnp.int32)                          # (tr, 1)

    m = jnp.max(x, axis=1, keepdims=True)
    z = x - m
    ez = jnp.exp(z)
    sumexp = jnp.sum(ez, axis=1, keepdims=True)
    logp = z - jnp.log(sumexp)

    cls = jax.lax.broadcasted_iota(jnp.int32, x.shape, 1)
    onehot = (cls == t).astype(jnp.float32)                   # (tr, C)

    logpt_w = jnp.sum(logp * (onehot * a_ref[...]), axis=1, keepdims=True)
    exp_zt = jnp.sum(ez * onehot, axis=1, keepdims=True)
    pt = exp_zt * pl.reciprocal(sumexp, approx=False)

    loss = -1.0 * _pow_gamma(1.0 - pt, gamma) * logpt_w       # (tr, 1)

    if valid_r % tile_r != 0:
        row = jax.lax.broadcasted_iota(jnp.int32, loss.shape, 0)
        loss = jnp.where(i * tile_r + row < valid_r, loss, 0.0)

    o_ref[...] = jnp.sum(loss, keepdims=True).reshape(1, 1, 1)


def _focal_loss_2d(x, target, gamma, alpha, size_average, tile_r_cap,
                   work_budget, vmem_limit):
    rows, c = x.shape
    t2 = target.reshape(rows, 1).astype(jnp.int32)
    a = _alpha_array(alpha, c).reshape(1, c)

    # Lane-sparse (C on lanes) but reads the logits exactly once from HBM —
    # no materialized transpose on the classification path.
    per_row = 2 * (128 * 4 + 128 * 4)      # padded x + t rows, double-buffered
    budget_rows = max(8, work_budget // per_row)
    tr = budget_rows if tile_r_cap is None else min(tile_r_cap, budget_rows)
    tr = max(8, (tr // 8) * 8)
    if rows <= tr:
        tr = rows
    num_rt = pl.cdiv(rows, tr)

    kernel = functools.partial(_focal_kernel_2d, gamma=gamma,
                               valid_r=rows, tile_r=tr)
    partial_sums = pl.pallas_call(
        kernel,
        out_shape=jax.ShapeDtypeStruct((num_rt, 1, 1), jnp.float32),
        grid_spec=pltpu.PrefetchScalarGridSpec(
            num_scalar_prefetch=0,
            grid=(num_rt,),
            in_specs=[
                pl.BlockSpec((tr, c), lambda i: (i, 0)),
                pl.BlockSpec((tr, 1), lambda i: (i, 0)),
                pl.BlockSpec((1, c), lambda i: (0, 0)),
            ],
            out_specs=pl.BlockSpec((1, 1, 1), lambda i: (i, 0, 0)),
        ),
        compiler_params=pltpu.CompilerParams(
            dimension_semantics=("parallel",),
            vmem_limit_bytes=vmem_limit),
    )(x, t2, a)

    loss_sum = jnp.sum(partial_sums)
    return loss_sum / rows if size_average else loss_sum


# ---------------------------------------------------------------------------
# Public wrapper (mirrors the PyTorch FocalLoss.forward).
# ---------------------------------------------------------------------------
def focal_loss(x, target, *, gamma=0, alpha=None, size_average=True,
               tile_p=None):
    """Pallas FocalLoss forward.

    x: (N, C, H, W) (or any (N, C, ...)) logits, or (rows, C) for plain
       classification.  target: integer class indices with matching layout.
    tile_p: optional cap on the pixel/row tile (testing / tuning only).
    """
    x = jnp.asarray(x)
    if not jnp.issubdtype(x.dtype, jnp.floating):
        x = x.astype(jnp.float32)
    target = jnp.asarray(target)

    cap = _vmem_capacity_bytes()
    work_budget = (cap * 3) // 8          # padded, double-buffered working set
    vmem_limit = (cap * 3) // 4           # ~96 MiB v5e/v6e, ~48 MiB v7x

    if x.ndim > 2:
        return _focal_loss_nchw(x, target, gamma, alpha, size_average, tile_p,
                                work_budget, vmem_limit)
    return _focal_loss_2d(x, target, gamma, alpha, size_average, tile_p,
                          work_budget, vmem_limit)


# ---------------------------------------------------------------------------
# Pure-JAX reference mirroring the PyTorch forward, and self-tests.
# ---------------------------------------------------------------------------
def _reference_focal_loss(x, target, gamma=0, alpha=None, size_average=True):
    x = jnp.asarray(x, jnp.float32)
    if x.ndim > 2:
        n, c = x.shape[0], x.shape[1]
        x = jnp.transpose(x.reshape(n, c, -1), (0, 2, 1)).reshape(-1, c)
    t = jnp.asarray(target, jnp.int32).reshape(-1)
    logp = jax.nn.log_softmax(x, axis=1)
    logpt = jnp.take_along_axis(logp, t[:, None], axis=1)[:, 0]
    pt = jnp.exp(logpt)
    if alpha is not None:
        if isinstance(alpha, (float, int)):
            alpha = [float(alpha), 1.0 - float(alpha)]
        a = jnp.asarray(alpha, jnp.float32)
        logpt = logpt * a[t]
    loss = -1.0 * (1.0 - pt) ** gamma * logpt
    return loss.mean() if size_average else loss.sum()


if __name__ == "__main__":
    key = jax.random.PRNGKey(0)
    ks = jax.random.split(key, 8)

    # Test 1: NCHW (2, 4, 16, 16) f32, list alpha, gamma=2, mean reduction.
    N, C, H, W = 2, 4, 16, 16
    logits = jax.random.normal(ks[0], (N, C, H, W), dtype=jnp.float32)
    target = jax.random.randint(ks[1], (N, H, W), 0, C, dtype=jnp.int32)
    alpha4 = [0.1, 0.2, 0.3, 0.4]
    out = focal_loss(logits, target, gamma=2, alpha=alpha4, size_average=True)
    out = jax.block_until_ready(out)
    ref = _reference_focal_loss(logits, target, gamma=2, alpha=alpha4,
                                size_average=True)
    assert jnp.allclose(out, ref, rtol=1e-4, atol=1e-5), (out, ref)

    # Test 2: bf16 logits (half HBM read traffic), gamma=0, no alpha, sum.
    out2 = focal_loss(logits.astype(jnp.bfloat16), target, gamma=0,
                      alpha=None, size_average=False)
    out2 = jax.block_until_ready(out2)
    ref2 = _reference_focal_loss(logits.astype(jnp.bfloat16), target,
                                 gamma=0, alpha=None, size_average=False)
    assert jnp.allclose(out2, ref2, rtol=1e-4, atol=1e-4), (out2, ref2)

    # Test 3: P=400 with forced tile_p=128 -> 4 tiles: exercises the 2-way
    # "parallel" pixel split (v7x megacore path) + partial-last-tile masking.
    logits3 = jax.random.normal(ks[2], (2, 4, 20, 20), dtype=jnp.float32)
    target3 = jax.random.randint(ks[3], (2, 20, 20), 0, 4, dtype=jnp.int32)
    out3 = focal_loss(logits3, target3, gamma=3, alpha=None,
                      size_average=True, tile_p=128)
    out3 = jax.block_until_ready(out3)
    ref3 = _reference_focal_loss(logits3, target3, gamma=3, alpha=None,
                                 size_average=True)
    assert jnp.allclose(out3, ref3, rtol=1e-4, atol=1e-5), (out3, ref3)

    # Test 4: N=1, odd tile count (17*17=289 -> 3 tiles of 128): no split,
    # masked tail, sum reduction, list alpha.
    logits4 = jax.random.normal(ks[4], (1, 4, 17, 17), dtype=jnp.float32)
    target4 = jax.random.randint(ks[5], (1, 17, 17), 0, 4, dtype=jnp.int32)
    out4 = focal_loss(logits4, target4, gamma=2, alpha=[0.4, 0.3, 0.2, 0.1],
                      size_average=False, tile_p=128)
    out4 = jax.block_until_ready(out4)
    ref4 = _reference_focal_loss(logits4, target4, gamma=2,
                                 alpha=[0.4, 0.3, 0.2, 0.1],
                                 size_average=False)
    assert jnp.allclose(out4, ref4, rtol=1e-4, atol=1e-5), (out4, ref4)

    # Test 5: 2-D classification path (rows, C) with scalar (binary) alpha —
    # dedicated kernel, no HBM-materializing transpose.
    logits5 = jax.random.normal(ks[6], (300, 2), dtype=jnp.float32)
    target5 = jax.random.randint(ks[7], (300,), 0, 2, dtype=jnp.int32)
    out5 = focal_loss(logits5, target5, gamma=2, alpha=0.25, size_average=True)
    out5 = jax.block_until_ready(out5)
    ref5 = _reference_focal_loss(logits5, target5, gamma=2, alpha=0.25,
                                 size_average=True)
    assert jnp.allclose(out5, ref5, rtol=1e-4, atol=1e-5), (out5, ref5)

    print("KERNEL_OK")
</pallas_src>

<mosaic_0001>
module attributes {stable_mosaic.version = 11 : i64} {
  func.func @_focal_kernel(%arg0: i32, %arg1: i32, %arg2: i32, %arg3: memref<1x4x256xf32, #tpu.memory_space<vmem>>, %arg4: memref<1x1x256xi8, #tpu.memory_space<vmem>>, %arg5: memref<1x4x1xf32, #tpu.memory_space<vmem>>, %arg6: memref<1x1x1xf32, #tpu.memory_space<vmem>>, %arg7: memref<1x1x256xf32, #tpu.memory_space<vmem>>) attributes {dimension_semantics = [#tpu.dimension_semantics<parallel>, #tpu.dimension_semantics<parallel>, #tpu.dimension_semantics<arbitrary>], iteration_bounds = array<i64: 2, 1, 1>, scalar_prefetch = 0 : i64, scratch_operands = 1 : i64, tpu.core_type = #tpu.core_type<tc>, window_params = [{transform_indices = @transform_0, window_bounds = array<i64: 1, 4, 256>}, {transform_indices = @transform_1, window_bounds = array<i64: 1, 1, 256>}, {pipeline_mode = #tpu.pipeline_mode<synchronous>, transform_indices = @transform_2, window_bounds = array<i64: 1, 4, 1>}, {transform_indices = @transform_3, window_bounds = array<i64: 1, 1, 1>}]} {
    %c0_i32 = arith.constant 0 : i32
    %0 = arith.cmpi eq, %arg2, %c0_i32 : i32
    %1 = arith.extui %0 : i1 to i32
    %c0_i32_0 = arith.constant 0 : i32
    %2 = arith.cmpi ne, %1, %c0_i32_0 : i32
    scf.if %2 {
      %cst_22 = arith.constant 0.000000e+00 : f32
      %44 = vector.broadcast %cst_22 : f32 to vector<1x1x256xf32>
      %c0_23 = arith.constant 0 : index
      %c0_24 = arith.constant 0 : index
      %c0_25 = arith.constant 0 : index
      %45 = vector.load %arg7[%c0_23, %c0_24, %c0_25] : memref<1x1x256xf32, #tpu.memory_space<vmem>>, vector<1x1x256xf32>
      tpu.vector_store %arg7[%c0_23, %c0_24, %c0_25], %44 {strides = array<i32>} : memref<1x1x256xf32, #tpu.memory_space<vmem>>, vector<1x1x256xf32>,
    } else {
    }
    %c0 = arith.constant 0 : index
    %c0_1 = arith.constant 0 : index
    %c0_2 = arith.constant 0 : index
    %3 = vector.load %arg3[%c0, %c0_1, %c0_2] : memref<1x4x256xf32, #tpu.memory_space<vmem>>, vector<1x4x256xf32>
    %c0_3 = arith.constant 0 : index
    %c0_4 = arith.constant 0 : index
    %c0_5 = arith.constant 0 : index
    %4 = vector.load %arg4[%c0_3, %c0_4, %c0_5] : memref<1x1x256xi8, #tpu.memory_space<vmem>>, vector<1x1x256xi8>
    %5 = arith.extsi %4 : vector<1x1x256xi8> to vector<1x1x256xi32>
    %cst = arith.constant dense<0xFF800000> : vector<1x256xf32>
    %6 = vector.multi_reduction <maximumf>, %3, %cst [1] : vector<1x4x256xf32> to vector<1x256xf32>
    %7 = vector.shape_cast %6 : vector<1x256xf32> to vector<1x1x256xf32>
    %8 = vector.broadcast %7 : vector<1x1x256xf32> to vector<1x4x256xf32>
    %9 = arith.subf %3, %8 : vector<1x4x256xf32>
    %10 = math.exp %9 : vector<1x4x256xf32>
    %cst_6 = arith.constant dense<0.000000e+00> : vector<1x256xf32>
    %11 = vector.multi_reduction <add>, %10, %cst_6 [1] : vector<1x4x256xf32> to vector<1x256xf32>
    %12 = vector.shape_cast %11 : vector<1x256xf32> to vector<1x1x256xf32>
    %13 = math.log %12 : vector<1x1x256xf32>
    %14 = vector.broadcast %13 : vector<1x1x256xf32> to vector<1x4x256xf32>
    %15 = arith.subf %9, %14 : vector<1x4x256xf32>
    %16 = tpu.iota {dimensions = array<i32: 1>} : vector<1x4x256xi32>
    %17 = vector.broadcast %5 : vector<1x1x256xi32> to vector<1x4x256xi32>
    %18 = arith.cmpi eq, %16, %17 : vector<1x4x256xi32>
    %19 = arith.extui %18 : vector<1x4x256xi1> to vector<1x4x256xi32>
    %20 = arith.sitofp %19 : vector<1x4x256xi32> to vector<1x4x256xf32>
    %c0_7 = arith.constant 0 : index
    %c0_8 = arith.constant 0 : index
    %c0_9 = arith.constant 0 : index
    %21 = vector.load %arg5[%c0_7, %c0_8, %c0_9] : memref<1x4x1xf32, #tpu.memory_space<vmem>>, vector<1x4x1xf32>
    %22 = vector.broadcast %21 : vector<1x4x1xf32> to vector<1x4x256xf32>
    %23 = arith.mulf %20, %22 : vector<1x4x256xf32>
    %24 = arith.mulf %15, %23 : vector<1x4x256xf32>
    %cst_10 = arith.constant dense<0.000000e+00> : vector<1x256xf32>
    %25 = vector.multi_reduction <add>, %24, %cst_10 [1] : vector<1x4x256xf32> to vector<1x256xf32>
    %26 = vector.shape_cast %25 : vector<1x256xf32> to vector<1x1x256xf32>
    %27 = arith.mulf %10, %20 : vector<1x4x256xf32>
    %cst_11 = arith.constant dense<0.000000e+00> : vector<1x256xf32>
    %28 = vector.multi_reduction <add>, %27, %cst_11 [1] : vector<1x4x256xf32> to vector<1x256xf32>
    %29 = vector.shape_cast %28 : vector<1x256xf32> to vector<1x1x256xf32>
    %30 = tpu.reciprocal %12 : vector<1x1x256xf32> -> vector<1x1x256xf32>
    %31 = arith.mulf %29, %30 : vector<1x1x256xf32>
    %cst_12 = arith.constant 1.000000e+00 : f32
    %32 = vector.broadcast %cst_12 : f32 to vector<1x1x256xf32>
    %33 = arith.subf %32, %31 : vector<1x1x256xf32>
    %34 = arith.mulf %33, %33 : vector<1x1x256xf32>
    %cst_13 = arith.constant -1.000000e+00 : f32
    %35 = vector.broadcast %cst_13 : f32 to vector<1x1x256xf32>
    %36 = arith.mulf %35, %34 : vector<1x1x256xf32>
    %37 = arith.mulf %36, %26 : vector<1x1x256xf32>
    %c0_14 = arith.constant 0 : index
    %c0_15 = arith.constant 0 : index
    %c0_16 = arith.constant 0 : index
    %38 = vector.load %arg7[%c0_14, %c0_15, %c0_16] : memref<1x1x256xf32, #tpu.memory_space<vmem>>, vector<1x1x256xf32>
    %39 = arith.addf %38, %37 : vector<1x1x256xf32>
    %c0_17 = arith.constant 0 : index
    %c0_18 = arith.constant 0 : index
    %c0_19 = arith.constant 0 : index
    %40 = vector.load %arg7[%c0_17, %c0_18, %c0_19] : memref<1x1x256xf32, #tpu.memory_space<vmem>>, vector<1x1x256xf32>
    tpu.vector_store %arg7[%c0_17, %c0_18, %c0_19], %39 {strides = array<i32>} : memref<1x1x256xf32, #tpu.memory_space<vmem>>, vector<1x1x256xf32>,
    %c0_i32_20 = arith.constant 0 : i32
    %41 = arith.cmpi eq, %arg2, %c0_i32_20 : i32
    %42 = arith.extui %41 : i1 to i32
    %c0_i32_21 = arith.constant 0 : i32
    %43 = arith.cmpi ne, %42, %c0_i32_21 : i32
    scf.if %43 {
      %c0_22 = arith.constant 0 : index
      %c0_23 = arith.constant 0 : index
      %c0_24 = arith.constant 0 : index
      %44 = vector.load %arg7[%c0_22, %c0_23, %c0_24] : memref<1x1x256xf32, #tpu.memory_space<vmem>>, vector<1x1x256xf32>
      %cst_25 = arith.constant dense<0.000000e+00> : vector<1x1xf32>
      %45 = vector.multi_reduction <add>, %44, %cst_25 [2] : vector<1x1x256xf32> to vector<1x1xf32>
      %46 = vector.shape_cast %45 : vector<1x1xf32> to vector<1x1x1xf32>
      %c0_26 = arith.constant 0 : index
      %c0_27 = arith.constant 0 : index
      %c0_28 = arith.constant 0 : index
      %47 = vector.load %arg6[%c0_26, %c0_27, %c0_28] : memref<1x1x1xf32, #tpu.memory_space<vmem>>, vector<1x1x1xf32>
      tpu.vector_store %arg6[%c0_26, %c0_27, %c0_28], %46 {strides = array<i32>} : memref<1x1x1xf32, #tpu.memory_space<vmem>>, vector<1x1x1xf32>,
    } else {
    }
    return
  }
  func.func @transform_0(%arg0: i32, %arg1: i32, %arg2: i32) -> (i32, i32, i32) {
    %c1_i32 = arith.constant 1 : i32
    %0 = arith.muli %arg1, %c1_i32 : i32
    %1 = arith.addi %0, %arg2 : i32
    %c0_i32 = arith.constant 0 : i32
    %c0_i32_0 = arith.constant 0 : i32
    return %arg0, %c0_i32, %1 : i32, i32, i32
  }
  func.func @transform_1(%arg0: i32, %arg1: i32, %arg2: i32) -> (i32, i32, i32) {
    %c1_i32 = arith.constant 1 : i32
    %0 = arith.muli %arg1, %c1_i32 : i32
    %1 = arith.addi %0, %arg2 : i32
    %c0_i32 = arith.constant 0 : i32
    %c0_i32_0 = arith.constant 0 : i32
    return %arg0, %c0_i32, %1 : i32, i32, i32
  }
  func.func @transform_2(%arg0: i32, %arg1: i32, %arg2: i32) -> (i32, i32, i32) {
    %c0_i32 = arith.constant 0 : i32
    %c0_i32_0 = arith.constant 0 : i32
    %c0_i32_1 = arith.constant 0 : i32
    %c0_i32_2 = arith.constant 0 : i32
    return %c0_i32, %c0_i32_0, %c0_i32_1 : i32, i32, i32
  }
  func.func @transform_3(%arg0: i32, %arg1: i32, %arg2: i32) -> (i32, i32, i32) {
    %c1_i32 = arith.constant 1 : i32
    %0 = arith.muli %arg0, %c1_i32 : i32
    %1 = arith.addi %0, %arg1 : i32
    %c0_i32 = arith.constant 0 : i32
    %c0_i32_0 = arith.constant 0 : i32
    %c0_i32_1 = arith.constant 0 : i32
    return %1, %c0_i32, %c0_i32_0 : i32, i32, i32
  }
}

</mosaic_0001>

<llo_original>
// kernel: tpu_custom_call.1
$region0: #{tpu_custom_call.1}
  #allocation0 [shape = 'u32[]', space=smem, size = 0x4, offset = 0x4, fixed_abs, tag = 'smem constant byte address 0x4 - core index']
  #allocation1 [shape = 'u32[72,128]{1,0:T(1,128)}', space=vmem, size = 0x9000, scoped, tag = 'internal scratch']
  #allocation2 [shape = 'f32[1,1,256]{2,1,0:T(1,128)}', space=vmem, size = 0x400, scoped, tag = 'scratch operand']
  %s0 = inlined_call_operand.hbm [shape: f32[2,4,256], index: 0, kind: input, shape index: {}]
  %s1 = inlined_call_operand.vmem [shape: s8[2,1,256], index: 1, kind: input, shape index: {}]
  %s2 = inlined_call_operand.vmem [shape: f32[1,4,1], index: 2, kind: input, shape index: {}]
  %s3 = inlined_call_operand.vmem [shape: f32[2,1,1], index: 3, kind: output, shape index: {}]
  %s4 = sld [smem:[#allocation0]]
  $region57: #{tpu_custom_call.1} parent=0
    _
  %s6 = ssub.s32 1, %s4
  %s7 = scalar_select 0, %s6, %s4
  $region1: #{tpu_custom_call.1} parent=0
    #allocation3 [shape = 'u8[8192]{0}', space=vmem, size = 0x2000, scoped, tag = 'input window, operand 0']
    #allocation4 [shape = 's32[2]{0}', space=sflag, size = 0x8, scoped, tag = 'scoped memory for tpu_custom_call.1']
    %8 = vsyncpa [#allocation4], 0
    %s9 = scalar_lea.sflag [#allocation4], 1
    %10 = vsyncpa %s9, 0
    loop: start=0, step=1, limit=4
    $region2: #{tpu_custom_call.1} parent=1 // loop_pre_header
      _
    $region3: #{tpu_custom_call.1} parent=1 // loop_header
      %s12 = sphi 0, %s16
      %p13 = scmp.ge.s32.totalorder %s12, 4
      %s19 = sphi 0, %s38
      %s20 = sphi 0, %s34
      %s21 = sphi 0, %s30
      %s22 = sphi 0, %s19
      %s23 = sphi 0, %s20
      %s24 = sphi 0, %s21
      %s25 = sphi 0, %s22
      %s26 = sphi 0, %s23
      %s27 = sphi 0, %s24
      %s45 = sphi 0, %s47
      %s48 = sphi 0, %s45
      %s49 = sphi 0, %s48
      %s65 = sphi 0, %s49
      %s75 = sphi 0, %s77
      %s78 = sphi 0, %s75
      %s79 = sphi 0, %s78
      %s95 = sphi 0, %s79
      %s99 = sphi 0, %s99
      %s101 = sphi 0, %s99
      %s102 = sphi 0, %s101
      %s116 = sphi 0, %s102
      %s124 = sphi 0, %s126
      %s127 = sphi 0, %s124
      %s128 = sphi 0, %s127
      %s144 = sphi 0, %s128
    $region4: #{tpu_custom_call.1} parent=1 // loop_header_branch
      %15 = sbr.rel (%p13) target = $region8
    $region5: #{tpu_custom_call.1} parent=1 // loop_body
      %s17 = ssub.s32 %s12, 1
      %s18 = ssub.s32 %s12, 2
      %s28 = sadd.s32 1, %s21
      %p29 = scmp.ge.s32.totalorder %s28, 1
      %s30 = scalar_select %p29, 0, %s28
      %s31 = sadd.s32 1, %s20
      %s32 = scalar_select %p29, %s31, %s20
      %p33 = scmp.ge.s32.totalorder %s32, 1
      %s34 = scalar_select %p33, 0, %s32
      %s35 = sadd.s32 1, %s19
      %s36 = scalar_select %p33, %s35, %s19
      %p37 = scmp.ge.s32.totalorder %s36, 2
      %s38 = scalar_select %p37, 0, %s36
      %s39 = sadd.s32 %s20, %s21
      %s40 = sadd.s32 %s34, %s30
      %s41 = ssub.s32 %s19, %s38
      %s42 = ssub.s32 %s39, %s40
      %s43 = sor.u32 %s41, %s42
      %p44 = scmp.eq.s32.totalorder %s43, 0
      %s46 = sadd.s32 %s45, 1
      %s47 = scalar_select %p44, %s45, %s46
      %p50 = pneg %p44
      %p51 = scmp.eq.s32.totalorder %s12, 1
      %p52 = por %p50, %p51
      %p53 = scmp.ne.s32.totalorder %s45, %s48
      %p54 = scmp.eq.s32.totalorder %s12, 0
      %p55 = por %p53, %p54
      %p56 = scmp.ne.s32.totalorder %s45, %s48
      %p57 = scmp.eq.s32.totalorder %s17, 1
      %p58 = por %p56, %p57
      %p59 = scmp.ne.s32.totalorder %s48, %s49
      %p60 = scmp.eq.s32.totalorder %s17, 0
      %p61 = por %p59, %p60
      %p62 = scmp.ne.s32.totalorder %s48, %s49
      %p63 = scmp.eq.s32.totalorder %s18, 1
      %p64 = por %p62, %p63
      %p66 = scmp.ne.s32.totalorder %s49, %s65
      %p67 = scmp.eq.s32.totalorder %s18, 0
      %p68 = por %p66, %p67
      %s69 = sadd.s32 %s20, %s21
      %s70 = sadd.s32 %s34, %s30
      %s71 = ssub.s32 %s19, %s38
      %s72 = ssub.s32 %s69, %s70
      %s73 = sor.u32 %s71, %s72
      %p74 = scmp.eq.s32.totalorder %s73, 0
      %s76 = sadd.s32 %s75, 1
      %s77 = scalar_select %p74, %s75, %s76
      %p80 = pneg %p74
      %p81 = scmp.eq.s32.totalorder %s12, 1
      %p82 = por %p80, %p81
      %p83 = scmp.ne.s32.totalorder %s75, %s78
      %p84 = scmp.eq.s32.totalorder %s12, 0
      %p85 = por %p83, %p84
      %p86 = scmp.ne.s32.totalorder %s75, %s78
      %p87 = scmp.eq.s32.totalorder %s17, 1
      %p88 = por %p86, %p87
      %p89 = scmp.ne.s32.totalorder %s78, %s79
      %p90 = scmp.eq.s32.totalorder %s17, 0
      %p91 = por %p89, %p90
      %p92 = scmp.ne.s32.totalorder %s78, %s79
      %p93 = scmp.eq.s32.totalorder %s18, 1
      %p94 = por %p92, %p93
      %p96 = scmp.ne.s32.totalorder %s79, %s95
      %p97 = scmp.eq.s32.totalorder %s18, 0
      %p98 = por %p96, %p97
      %s100 = sadd.s32 %s99, 1
      %p103 = scmp.eq.s32.totalorder %s12, 1
      %p104 = scmp.ne.s32.totalorder %s99, %s101
      %p105 = scmp.eq.s32.totalorder %s12, 0
      %p106 = por %p104, %p105
      %p107 = scmp.ne.s32.totalorder %s99, %s101
      %p108 = scmp.eq.s32.totalorder %s17, 1
      %p109 = por %p107, %p108
      %p110 = scmp.ne.s32.totalorder %s101, %s102
      %p111 = scmp.eq.s32.totalorder %s17, 0
      %p112 = por %p110, %p111
      %p113 = scmp.ne.s32.totalorder %s101, %s102
      %p114 = scmp.eq.s32.totalorder %s18, 1
      %p115 = por %p113, %p114
      %p117 = scmp.ne.s32.totalorder %s102, %s116
      %p118 = scmp.eq.s32.totalorder %s18, 0
      %p119 = por %p117, %p118
      %s120 = sadd.s32 %s19, %s20
      %s121 = sadd.s32 %s38, %s34
      %s122 = ssub.s32 %s120, %s121
      %p123 = scmp.eq.s32.totalorder %s122, 0
      %s125 = sadd.s32 %s124, 1
      %s126 = scalar_select %p123, %s124, %s125
      %p129 = pneg %p123
      %p130 = scmp.eq.s32.totalorder %s12, 1
      %p131 = por %p129, %p130
      %p132 = scmp.ne.s32.totalorder %s124, %s127
      %p133 = scmp.eq.s32.totalorder %s12, 0
      %p134 = por %p132, %p133
      %p135 = scmp.ne.s32.totalorder %s124, %s127
      %p136 = scmp.eq.s32.totalorder %s17, 1
      %p137 = por %p135, %p136
      %p138 = scmp.ne.s32.totalorder %s127, %s128
      %p139 = scmp.eq.s32.totalorder %s17, 0
      %p140 = por %p138, %p139
      %p141 = scmp.ne.s32.totalorder %s127, %s128
      %p142 = scmp.eq.s32.totalorder %s18, 1
      %p143 = por %p141, %p142
      %p145 = scmp.ne.s32.totalorder %s128, %s144
      %p146 = scmp.eq.s32.totalorder %s18, 0
      %p147 = por %p145, %p146
      %p148 = scmp.le.s32.totalorder 1, %s12
      %p149 = scmp.lt.s32.totalorder %s12, 3
      %p150 = pnand %p148, %p149
      %p151 = pneg %p150
      // Predicated region
      $region9: #{tpu_custom_call.1} parent=5 // pred_check
        _
      $region10: #{tpu_custom_call.1} parent=5 // pred_check_branch
        %153 = sbr.rel (%p150) target = $region12
      $region11: #{tpu_custom_call.1} parent=5 // pred_region
        %s154 = ssub.s32 %s12, 1
        // Predicated region
        $region13: #{tpu_custom_call.1} parent=11 // pred_check
          %p155 = pneg %p112
        $region14: #{tpu_custom_call.1} parent=11 // pred_check_branch
          %157 = sbr.rel (%p155) target = $region16
        $region15: #{tpu_custom_call.1} parent=11 // pred_region
          _
        $region16: #{tpu_custom_call.1} parent=11 // pred_fallthru
          _
      $region12: #{tpu_custom_call.1} parent=5 // pred_fallthru
        _
      %p158 = scmp.lt.s32.totalorder %s12, 2
      // Predicated region
      $region17: #{tpu_custom_call.1} parent=5 // pred_check
        %p159 = pneg %p158
      $region18: #{tpu_custom_call.1} parent=5 // pred_check_branch
        %161 = sbr.rel (%p159) target = $region20
      $region19: #{tpu_custom_call.1} parent=5 // pred_region
        // Predicated region
        $region21: #{tpu_custom_call.1} parent=19 // pred_check
          %p162 = pneg %p55
        $region22: #{tpu_custom_call.1} parent=19 // pred_check_branch
          %164 = sbr.rel (%p162) target = $region24
        $region23: #{tpu_custom_call.1} parent=19 // pred_region
          %s165 = sand.u32 %s45, 1
          %s166 = scalar_lea.sflag [#allocation4], %s165
          %s167 = sand.u32 %s45, 1
          %s168 = smul.addr %s167, 8
          %s169 = scalar_lea.vmem [#allocation3], %s168
          %s170 = sadd.s32 %s20, %s21
          %s171 = smul.u32 2, %s170
          %173 = vsyncadd %s166, 0
          %s174 = smul.addr %s19, 2
          %s175 = sadd.s32 %s171, %s174
          %s176 = smul.addr %s175, 4
          %s177 = scalar_lea.hbm %s0, %s176
          %s179 = sshll.u32 %s177, 4
          %s180 = int_to_ptr.hbm [resolvable:$true] %s179
          %s181 = sshll.u32 %s169, 4
          %s182 = int_to_ptr.vmem [resolvable:$true] %s181
          %184 = dma.hbm_to_vmem [thread:$0]  %s180, 128, %s182, %s166
        $region24: #{tpu_custom_call.1} parent=19 // pred_fallthru
          _
        // Predicated region
        $region25: #{tpu_custom_call.1} parent=19 // pred_check
          %p185 = pneg %p85
        $region26: #{tpu_custom_call.1} parent=19 // pred_check_branch
          %187 = sbr.rel (%p185) target = $region28
        $region27: #{tpu_custom_call.1} parent=19 // pred_region
          %s188 = sadd.s32 %s20, %s21
          %s189 = smul.u32 2, %s188
          %p190 = scmp.lt.s32.totalorder %s19, 1
          %s191 = scalar_select %p190, %s19, 1
          %p192 = scmp.lt.s32.totalorder %s189, 1
          %s193 = scalar_select %p192, %s189, 1
          %s194 = smul.addr %s191, 2
          %s195 = sadd.s32 %s193, %s194
          %s196 = scalar_lea.vmem %s1, %s195
          %s197 = sadd.s32 %s20, %s21
          %s198 = smul.u32 2, %s197
        $region28: #{tpu_custom_call.1} parent=19 // pred_fallthru
          _
      $region20: #{tpu_custom_call.1} parent=5 // pred_fallthru
        _
      %p199 = scmp.le.s32.totalorder 1, %s12
      %p200 = scmp.lt.s32.totalorder %s12, 3
      %p201 = pnand %p199, %p200
      %p202 = pneg %p201
      // Predicated region
      $region29: #{tpu_custom_call.1} parent=5 // pred_check
        _
      $region30: #{tpu_custom_call.1} parent=5 // pred_check_branch
        %204 = sbr.rel (%p201) target = $region32
      $region31: #{tpu_custom_call.1} parent=5 // pred_region
        %s205 = ssub.s32 %s12, 1
        %s206 = sand.u32 %s48, 1
        %s207 = scalar_lea.sflag [#allocation4], %s206
        %s208 = sand.u32 %s48, 1
        %s209 = smul.addr %s208, 8
        %s210 = scalar_lea.vmem [#allocation3], %s209
        // Predicated region
        $region33: #{tpu_custom_call.1} parent=31 // pred_check
          %p211 = pneg %p61
        $region34: #{tpu_custom_call.1} parent=31 // pred_check_branch
          %213 = sbr.rel (%p211) target = $region36
        $region35: #{tpu_custom_call.1} parent=31 // pred_region
          %215 = dma.done %s207, 128
        $region36: #{tpu_custom_call.1} parent=31 // pred_fallthru
          _
        %s216 = sand.u32 %s48, 1
        %s217 = scalar_lea.sflag [#allocation4], %s216
        %s218 = sand.u32 %s48, 1
        %s219 = smul.addr %s218, 8
        %s220 = scalar_lea.vmem [#allocation3], %s219
        %p221 = pneg %p61
        %p222 = pneg %p58
        %s223 = sadd.s32 %s23, %s24
        %s224 = smul.u32 2, %s223
        %p225 = scmp.lt.s32.totalorder %s22, 1
        %s226 = scalar_select %p225, %s22, 1
        %p227 = scmp.lt.s32.totalorder %s224, 1
        %s228 = scalar_select %p227, %s224, 1
        %s229 = smul.addr %s226, 2
        %s230 = sadd.s32 %s228, %s229
        %s231 = scalar_lea.vmem %s1, %s230
        %p232 = pneg %p91
        %p233 = pneg %p88
        %p234 = pneg %p112
        %p235 = pneg %p109
        %p236 = pneg %p140
        %p237 = pneg %p137
        %s238 = sadd.s32 %s22, %s23
        %p239 = scmp.lt.s32.totalorder %s238, 1
        %s240 = scalar_select %p239, %s238, 1
        %s241 = scalar_lea.vmem %s3, %s240
        %s242 = sadd.s32 %s23, %s24
        %s243 = smul.u32 2, %s242
        %s244 = sadd.s32 %s23, %s24
        %s245 = smul.u32 2, %s244
        %p246 = scmp.lt.s32.totalorder %s22, 1
        %s247 = scalar_select %p246, %s22, 1
        %p248 = scmp.lt.s32.totalorder %s245, 1
        %s249 = scalar_select %p248, %s245, 1
        %s250 = smul.addr %s247, 2
        %s251 = sadd.s32 %s249, %s250
        %s252 = scalar_lea.vmem %s1, %s251
        %s253 = sadd.s32 %s23, %s24
        %s254 = smul.u32 2, %s253
        %s255 = sadd.s32 %s22, %s23
        %p256 = scmp.lt.s32.totalorder %s255, 1
        %s257 = scalar_select %p256, %s255, 1
        %s258 = scalar_lea.vmem %s3, %s257
        %s259 = sadd.s32 %s22, %s23
        %p260 = scmp.eq.s32.totalorder %s24, 0
        // Predicated region
        $region37: #{tpu_custom_call.1} parent=31 // pred_check
          %p261 = pneg %p260
        $region38: #{tpu_custom_call.1} parent=31 // pred_check_branch
          %263 = sbr.rel (%p261) target = $region40
        $region39: #{tpu_custom_call.1} parent=31 // pred_region
          %v264 = vlaneseq
          %vm265 = vcmp.ge.s32.totalorder %v264, 0
          %vm266 = vcmp.lt.s32.totalorder %v264, 256
          %vm267 = vmand %vm265, %vm266
          %268 = vst.msk [vmem:[#allocation2] sm:$0x3] %vm267, 0.0
        $region40: #{tpu_custom_call.1} parent=31 // pred_fallthru
          _
        %v269 = vld [vmem:[%s210] sm:$0xff]
        %v270 = vld [vmem:[%s252] sm:$0x3]
        %v271 = vunpack.c.0.s8 %v270
        %273 = vst [vmem:[#allocation1] ss:$2 sm:$0xff] %v269
        %v274 = vld.sshfl [vmem:[#allocation1] sm:$0xff pattern:$0x75316420]
        %v275 = vld.sshfl [vmem:[#allocation1 + $0x8] sm:$0xff pattern:$0x75316420]
        %vm278 = vcmask 1043456
        %v279 = vsel %vm278, %v274, -inf
        %v280 = vrot.slane %v279, 4
        %v281 = vmax.f32 %v279, %v280
        %v282 = vrot.slane %v281, 2
        %v283 = vmax.f32 %v281, %v282
        %v284 = vrot.slane %v283, 1
        %v285 = vmax.f32 %v283, %v284
        %v286 = vsel %vm278, %v275, -inf
        %v287 = vrot.slane %v286, 4
        %v288 = vmax.f32 %v286, %v287
        %v289 = vrot.slane %v288, 2
        %v290 = vmax.f32 %v288, %v289
        %v291 = vrot.slane %v290, 1
        %v292 = vmax.f32 %v290, %v291
        %v295 = vrot.slane %v292, 4
        %v296 = vsel %vm278, %v285, %v295
        %v298 = vsub.f32 %v269, %v296
        %v299 = vmul.f32 %v298, 1.442695
        %v300 = vpow.pop %v299
        %302 = vst [vmem:[#allocation1] ss:$2 sm:$0xff] %v300
        %v303 = vld.sshfl [vmem:[#allocation1] sm:$0xff pattern:$0x75316420]
        %v304 = vld.sshfl [vmem:[#allocation1 + $0x8] sm:$0xff pattern:$0x75316420]
        %v307 = vsel %vm278, %v303, 0.0
        %v308 = vrot.slane %v307, 4
        %v309 = vadd.f32 %v307, %v308
        %v310 = vrot.slane %v309, 2
        %v311 = vadd.f32 %v309, %v310
        %v312 = vrot.slane %v311, 1
        %v313 = vadd.f32 %v311, %v312
        %v314 = vsel %vm278, %v304, 0.0
        %v315 = vrot.slane %v314, 4
        %v316 = vadd.f32 %v314, %v315
        %v317 = vrot.slane %v316, 2
        %v318 = vadd.f32 %v316, %v317
        %v319 = vrot.slane %v318, 1
        %v320 = vadd.f32 %v318, %v319
        %v321 = vlog2.pop %v313
        %v322 = vmul.f32 %v321, 0.6931472
        %v323 = vlog2.pop %v320
        %v324 = vmul.f32 %v323, 0.6931472
        %v327 = vrot.slane %v324, 4
        %v328 = vsel %vm278, %v322, %v327
        %v330 = vsub.f32 %v298, %v328
        %v331 = vlaneseq
        %v332 = vshrl.u32 %v331, 7
        %v333 = vperm.slane %v271, 0
        %v334 = vperm.slane %v271, 4
        %v335 = vperm.slane %v333, 0
        %v336 = vperm.slane %v334, 0
        %vm337 = vcmp.eq.s32.totalorder %v332, %v335
        %vm338 = vcmp.eq.s32.totalorder %v332, %v336
        %v339 = vsel %vm337, 1, 0
        %v340 = vsel %vm338, 1, 0
        %v341 = vcvt.s32.f32 %v339
        %v342 = vcvt.s32.f32 %v340
        %v343 = vld [vmem:[%s2] sm:$0xf]
        %345 = vset.pattern.permute.xlu0 0
        %346 = vperm.xlu0 %345, %v343
        %v347 = vpop.permute.xlu0 %346
        %v349 = vmul.f32 %v341, %v347
        %v350 = vmul.f32 %v342, %v347
        %v353 = vrot.slane %v350, 4
        %v354 = vsel %vm278, %v349, %v353
        %v356 = vmul.f32 %v330, %v354
        %358 = vst [vmem:[#allocation1] ss:$2 sm:$0xff] %v356
        %v359 = vld.sshfl [vmem:[#allocation1] sm:$0xff pattern:$0x75316420]
        %v360 = vld.sshfl [vmem:[#allocation1 + $0x8] sm:$0xff pattern:$0x75316420]
        %v363 = vsel %vm278, %v359, 0.0
        %v364 = vrot.slane %v363, 4
        %v365 = vadd.f32 %v363, %v364
        %v366 = vrot.slane %v365, 2
        %v367 = vadd.f32 %v365, %v366
        %v368 = vrot.slane %v367, 1
        %v369 = vadd.f32 %v367, %v368
        %v370 = vsel %vm278, %v360, 0.0
        %v371 = vrot.slane %v370, 4
        %v372 = vadd.f32 %v370, %v371
        %v373 = vrot.slane %v372, 2
        %v374 = vadd.f32 %v372, %v373
        %v375 = vrot.slane %v374, 1
        %v376 = vadd.f32 %v374, %v375
        %v379 = vrot.slane %v342, 4
        %v380 = vsel %vm278, %v341, %v379
        %v382 = vmul.f32 %v300, %v380
        %384 = vst [vmem:[#allocation1] ss:$2 sm:$0xff] %v382
        %v385 = vld.sshfl [vmem:[#allocation1] sm:$0xff pattern:$0x75316420]
        %v386 = vld.sshfl [vmem:[#allocation1 + $0x8] sm:$0xff pattern:$0x75316420]
        %v389 = vsel %vm278, %v385, 0.0
        %v390 = vrot.slane %v389, 4
        %v391 = vadd.f32 %v389, %v390
        %v392 = vrot.slane %v391, 2
        %v393 = vadd.f32 %v391, %v392
        %v394 = vrot.slane %v393, 1
        %v395 = vadd.f32 %v393, %v394
        %v396 = vsel %vm278, %v386, 0.0
        %v397 = vrot.slane %v396, 4
        %v398 = vadd.f32 %v396, %v397
        %v399 = vrot.slane %v398, 2
        %v400 = vadd.f32 %v398, %v399
        %v401 = vrot.slane %v400, 1
        %v402 = vadd.f32 %v400, %v401
        %v403 = vrcp.pop %v313
        %v404 = vmul.f32 %v313, %v403
        %v405 = vsub.f32 1.0, %v404
        %v406 = vmul.f32 %v403, %v405
        %v407 = vadd.f32 %v403, %v406
        %vm408 = vweird.f32 %v313
        %vm409 = vweird.f32 %v403
        %vm410 = vmor %vm408, %vm409
        %v411 = vsel %vm410, %v403, %v407
        %v412 = vand.u32 2147483647, %v313
        %vm413 = vcmp.eq.f32.partialorder %v412, 8.507059e+37
        %v414 = vand.u32 %v313, 2147483648
        %v415 = vor.u32 1.1754944e-38, %v414
        %v416 = vsel %vm413, %v415, %v411
        %v417 = vrcp.pop %v320
        %v418 = vmul.f32 %v320, %v417
        %v419 = vsub.f32 1.0, %v418
        %v420 = vmul.f32 %v417, %v419
        %v421 = vadd.f32 %v417, %v420
        %vm422 = vweird.f32 %v320
        %vm423 = vweird.f32 %v417
        %vm424 = vmor %vm422, %vm423
        %v425 = vsel %vm424, %v417, %v421
        %v426 = vand.u32 2147483647, %v320
        %vm427 = vcmp.eq.f32.partialorder %v426, 8.507059e+37
        %v428 = vand.u32 %v320, 2147483648
        %v429 = vor.u32 1.1754944e-38, %v428
        %v430 = vsel %vm427, %v429, %v425
        %v431 = vmul.f32 %v395, %v416
        %v432 = vmul.f32 %v402, %v430
        %v433 = vsub.f32 1.0, %v431
        %v434 = vsub.f32 1.0, %v432
        %v435 = vmul.f32 %v433, %v433
        %v436 = vmul.f32 %v434, %v434
        %v437 = vmul.f32 %v435, -1.0
        %v438 = vmul.f32 %v436, -1.0
        %v439 = vmul.f32 %v437, %v369
        %v440 = vmul.f32 %v438, %v376
        %v441 = vld [vmem:[#allocation2] sm:$0x3]
        %v444 = vrot.slane %v440, 7
        %vm445 = vcmask 1040384
        %v446 = vsel %vm445, %v439, %v444
        %v448 = vadd.f32 %v441, %v446
        %v449 = vlaneseq
        %vm450 = vcmp.ge.s32.totalorder %v449, 0
        %vm451 = vcmp.lt.s32.totalorder %v449, 256
        %vm452 = vmand %vm450, %vm451
        %453 = vst.msk [vmem:[#allocation2] sm:$0x3] %vm452, %v448
        // Predicated region
        $region41: #{tpu_custom_call.1} parent=31 // pred_check
          %p454 = pneg %p260
        $region42: #{tpu_custom_call.1} parent=31 // pred_check_branch
          %456 = sbr.rel (%p454) target = $region44
        $region43: #{tpu_custom_call.1} parent=31 // pred_region
          %v457 = vld [vmem:[#allocation2] sm:$0x3]
          %v459 = vperm.slane %v457, 0
          %v460 = vperm.slane %v457, 1
          %v463 = vsel %vm445, %v459, 0.0
          %v464 = vsel %vm445, %v460, 0.0
          %v465 = vadd.f32 %v463, %v464
          %466 = vadd.xlane.f32.xlu0 %v465
          %v467 = vpop.xlane.xlu0 %466
          %vm468 = vcmask 0
          %469 = vst.msk [vmem:[%s258] sm:$0x1] %vm468, %v467
        $region44: #{tpu_custom_call.1} parent=31 // pred_fallthru
          _
        %s470 = sadd.s32 %s22, %s23
        %p471 = scmp.lt.s32.totalorder %s470, 1
        %s472 = scalar_select %p471, %s470, 1
        %s473 = scalar_lea.vmem %s3, %s472
        // Predicated region
        $region45: #{tpu_custom_call.1} parent=31 // pred_check
          %p474 = pneg %p137
        $region46: #{tpu_custom_call.1} parent=31 // pred_check_branch
          %476 = sbr.rel (%p474) target = $region48
        $region47: #{tpu_custom_call.1} parent=31 // pred_region
          %s477 = sadd.s32 %s22, %s23
        $region48: #{tpu_custom_call.1} parent=31 // pred_fallthru
          _
      $region32: #{tpu_custom_call.1} parent=5 // pred_fallthru
        _
      %p478 = scmp.le.s32.totalorder 2, %s12
      // Predicated region
      $region49: #{tpu_custom_call.1} parent=5 // pred_check
        %p479 = pneg %p478
      $region50: #{tpu_custom_call.1} parent=5 // pred_check_branch
        %481 = sbr.rel (%p479) target = $region52
      $region51: #{tpu_custom_call.1} parent=5 // pred_region
        %s482 = ssub.s32 %s12, 2
        // Predicated region
        $region53: #{tpu_custom_call.1} parent=51 // pred_check
          %p483 = pneg %p143
        $region54: #{tpu_custom_call.1} parent=51 // pred_check_branch
          %485 = sbr.rel (%p483) target = $region56
        $region55: #{tpu_custom_call.1} parent=51 // pred_region
          %s486 = sadd.s32 %s25, %s26
          %p487 = scmp.lt.s32.totalorder %s486, 1
          %s488 = scalar_select %p487, %s486, 1
          %s489 = scalar_lea.vmem %s3, %s488
        $region56: #{tpu_custom_call.1} parent=51 // pred_fallthru
          _
      $region52: #{tpu_custom_call.1} parent=5 // pred_fallthru
        _
    $region6: #{tpu_custom_call.1} parent=1 // loop_footer
      %s16 = sadd.s32 1, %s12
    $region7: #{tpu_custom_call.1} parent=1 // loop_footer_branch
      %11 = sbr.rel target = $region3
    $region8: #{tpu_custom_call.1} parent=1 // loop_exit
      _
    %490 = vsyncpa [#allocation4], 1
    %s491 = scalar_lea.sflag [#allocation4], 1
    %492 = vsyncpa %s491, 1

</llo_original>
